<compile_context>
chip_gen: v6e
topology: v6e:2x2x1
jax: 0.10.0
libtpu: 0.0.40
codegen_flags: <defaults>
</compile_context>

<pallas_src>
import functools
import math

import jax
import jax.numpy as jnp
from jax.experimental import pallas as pl
from jax.experimental.pallas import tpu as pltpu


def _round_up(n, m):
    return ((n + m - 1) // m) * m


def feat_bottleneck_kernel(x_ref, w_ref, b_ref, o_ref):
    # One MXU pass per batch tile: cast x in-kernel, f32 accumulate, bias add, store.
    x = x_ref[...].astype(w_ref.dtype)
    acc = jnp.dot(x, w_ref[...], preferred_element_type=jnp.float32)
    o_ref[...] = (acc + b_ref[...]).astype(o_ref.dtype)


def prepare_feat_bottleneck_params(w1, b1, w2, b2, *, compute_dtype=jnp.bfloat16):
    """Build the fused, padded parameters ONCE (per weight update).

    w1: (feature_dim, bottleneck_dim)  b1: (1, bottleneck_dim)
    w2: (bottleneck_dim, class_num)    b2: (1, class_num)

    NOTE: the fusion is only valid for type='ori' (bn/dropout are Identity). Do not
    reuse for type='bn' or with active dropout.
    """
    F = w1.shape[0]
    C = w2.shape[1]
    w_fused = jnp.dot(w1, w2, preferred_element_type=jnp.float32)        # (F, C)
    b_fused = jnp.dot(b1, w2, preferred_element_type=jnp.float32) + b2   # (1, C)

    C_pad = _round_up(C, 128)  # lane-dense, unmasked output stores
    w_p = jnp.zeros((F, C_pad), compute_dtype).at[:, :C].set(w_fused.astype(compute_dtype))
    b_p = jnp.zeros((1, C_pad), jnp.float32).at[:, :C].set(b_fused)
    return w_p, b_p, C


def feat_bottleneck_apply(x, w_p, b_p, class_num, *, block_b=4096, out_dtype=None):
    """Hot path: one pallas_call.  x: (B, feature_dim) -> (B, class_num)."""
    B, F = x.shape
    C_pad = w_p.shape[1]
    out_dtype = x.dtype if out_dtype is None else out_dtype

    # Batch tile: multiple of 8 (sublane), no B padding needed (cdiv grid + masked edge
    # stores). Ensure >=2 tiles when B allows so the "parallel" axis can use both TCs on v7x.
    tb = min(block_b, _round_up(B, 8))
    tb = _round_up(tb, 8)
    if pl.cdiv(B, tb) == 1 and _round_up(B, 8) > 8:
        tb = _round_up(_round_up(B, 8) // 2, 8)
    grid = (pl.cdiv(B, tb),)

    # Scoped-VMEM budget: double-buffered x/out tiles + resident weight/bias, with headroom.
    out_itemsize = jnp.dtype(out_dtype).itemsize
    need = (2 * tb * (F * x.dtype.itemsize + C_pad * out_itemsize)
            + w_p.size * w_p.dtype.itemsize + b_p.size * 4)
    vmem_limit = int(min(max(2 * need, 16 * 1024 * 1024), 48 * 1024 * 1024))

    out_padded = pl.pallas_call(
        feat_bottleneck_kernel,
        out_shape=jax.ShapeDtypeStruct((B, C_pad), out_dtype),
        grid=grid,
        in_specs=[
            pl.BlockSpec((tb, F), lambda i: (i, 0)),       # x streamed over B (no padding)
            pl.BlockSpec((F, C_pad), lambda i: (0, 0)),    # fused weight, VMEM-resident
            pl.BlockSpec((1, C_pad), lambda i: (0, 0)),    # fused bias, VMEM-resident
        ],
        out_specs=pl.BlockSpec((tb, C_pad), lambda i: (i, 0)),
        compiler_params=pltpu.CompilerParams(
            dimension_semantics=("parallel",),
            vmem_limit_bytes=vmem_limit,
        ),
    )(x, w_p, b_p)
    # TODO(synk): fuse this narrow slice into the consumer's jit; kept here for a
    # self-contained module-equivalent output.
    return out_padded[:, :class_num]


def xavier_normal(key, fan_out, fan_in, dtype=jnp.float32):
    # matches nn.init.xavier_normal_ for a (fan_out, fan_in) PyTorch Linear weight
    std = math.sqrt(2.0 / (fan_in + fan_out))
    return std * jax.random.normal(key, (fan_out, fan_in), dtype=dtype)


if __name__ == "__main__":
    # small shapes consistent with the module
    batch, feature_dim, bottleneck_dim, class_num = 8, 64, 256, 10

    key = jax.random.PRNGKey(0)
    kx, k1, k2 = jax.random.split(key, 3)

    x = jax.random.normal(kx, (batch, feature_dim), dtype=jnp.float32)

    # bottleneck: Linear(feature_dim, bottleneck_dim), xavier_normal weight, zero bias
    w_bottleneck = xavier_normal(k1, bottleneck_dim, feature_dim)   # (D, F) PyTorch layout
    b_bottleneck = jnp.zeros((bottleneck_dim,), jnp.float32)
    # fc: Linear(bottleneck_dim, class_num)
    w_fc = xavier_normal(k2, class_num, bottleneck_dim)             # (C, D) PyTorch layout
    b_fc = jnp.zeros((class_num,), jnp.float32)

    # glue: pre-transpose weights to (in, out), biases to (1, out)
    w1 = jnp.transpose(w_bottleneck)          # (F, D)
    b1 = b_bottleneck.reshape(1, -1)          # (1, D)
    w2 = jnp.transpose(w_fc)                  # (D, C)
    b2 = b_fc.reshape(1, -1)                  # (1, C)

    # Hoisted off the hot path: fuse + pad + cast once.
    w_p, b_p, C = prepare_feat_bottleneck_params(w1, b1, w2, b2)

    apply_fn = jax.jit(
        functools.partial(feat_bottleneck_apply, class_num=C))
    out = apply_fn(x, w_p, b_p)
    out = jax.block_until_ready(out)

    # reference: exact module forward in f32 (two linears, identity bn/dropout)
    ref = (x @ w1 + b1) @ w2 + b2
    assert out.shape == (batch, class_num)
    # bf16 fused weight + in-kernel bf16 x cast (f32 accumulate) -> loose-but-safe tolerance
    assert jnp.allclose(out, ref, atol=5e-2, rtol=5e-2), float(
        jnp.max(jnp.abs(out - ref)))

    print("KERNEL_OK")
</pallas_src>

<mosaic_0001>
module attributes {stable_mosaic.version = 11 : i64} {
  func.func @feat_bottleneck_kernel(%arg0: i32, %arg1: memref<8x64xf32, #tpu.memory_space<vmem>>, %arg2: memref<64x128xbf16, #tpu.memory_space<vmem>>, %arg3: memref<1x128xf32, #tpu.memory_space<vmem>>, %arg4: memref<8x128xf32, #tpu.memory_space<vmem>>) attributes {dimension_semantics = [#tpu.dimension_semantics<parallel>], iteration_bounds = array<i64: 1>, scalar_prefetch = 0 : i64, scratch_operands = 0 : i64, tpu.core_type = #tpu.core_type<tc>, window_params = [{transform_indices = @transform_0, window_bounds = array<i64: 8, 64>}, {pipeline_mode = #tpu.pipeline_mode<synchronous>, transform_indices = @transform_1, window_bounds = array<i64: 64, 128>}, {pipeline_mode = #tpu.pipeline_mode<synchronous>, transform_indices = @transform_2, window_bounds = array<i64: 1, 128>}, {transform_indices = @transform_3, window_bounds = array<i64: 8, 128>}]} {
    %c0 = arith.constant 0 : index
    %c0_0 = arith.constant 0 : index
    %0 = vector.load %arg1[%c0, %c0_0] : memref<8x64xf32, #tpu.memory_space<vmem>>, vector<8x64xf32>
    %1 = arith.truncf %0 : vector<8x64xf32> to vector<8x64xbf16>
    %c0_1 = arith.constant 0 : index
    %c0_2 = arith.constant 0 : index
    %2 = vector.load %arg2[%c0_1, %c0_2] : memref<64x128xbf16, #tpu.memory_space<vmem>>, vector<64x128xbf16>
    %cst = arith.constant dense<0.000000e+00> : vector<8x128xf32>
    %3 = tpu.matmul %1, %2, %cst {dimension_numbers = #tpu.dot_dimension_numbers<[1], [0], [0], [1], [0, 0, 1, 1], [], []>} : vector<8x64xbf16>, vector<64x128xbf16>, vector<8x128xf32> -> vector<8x128xf32>
    %c0_3 = arith.constant 0 : index
    %c0_4 = arith.constant 0 : index
    %4 = vector.load %arg3[%c0_3, %c0_4] : memref<1x128xf32, #tpu.memory_space<vmem>>, vector<1x128xf32>
    %5 = vector.broadcast %4 : vector<1x128xf32> to vector<8x128xf32>
    %6 = arith.addf %3, %5 : vector<8x128xf32>
    %c0_5 = arith.constant 0 : index
    %c0_6 = arith.constant 0 : index
    %7 = vector.load %arg4[%c0_5, %c0_6] : memref<8x128xf32, #tpu.memory_space<vmem>>, vector<8x128xf32>
    tpu.vector_store %arg4[%c0_5, %c0_6], %6 {strides = array<i32>} : memref<8x128xf32, #tpu.memory_space<vmem>>, vector<8x128xf32>,
    return
  }
  func.func @transform_0(%arg0: i32) -> (i32, i32) {
    %c0_i32 = arith.constant 0 : i32
    %c0_i32_0 = arith.constant 0 : i32
    return %arg0, %c0_i32 : i32, i32
  }
  func.func @transform_1(%arg0: i32) -> (i32, i32) {
    %c0_i32 = arith.constant 0 : i32
    %c0_i32_0 = arith.constant 0 : i32
    %c0_i32_1 = arith.constant 0 : i32
    return %c0_i32, %c0_i32_0 : i32, i32
  }
  func.func @transform_2(%arg0: i32) -> (i32, i32) {
    %c0_i32 = arith.constant 0 : i32
    %c0_i32_0 = arith.constant 0 : i32
    %c0_i32_1 = arith.constant 0 : i32
    return %c0_i32, %c0_i32_0 : i32, i32
  }
  func.func @transform_3(%arg0: i32) -> (i32, i32) {
    %c0_i32 = arith.constant 0 : i32
    %c0_i32_0 = arith.constant 0 : i32
    return %arg0, %c0_i32 : i32, i32
  }
}

</mosaic_0001>

<llo_original>
// kernel: feat_bottleneck_apply.1
$region0: #{feat_bottleneck_apply.1}
  #allocation0 [shape = 'u32[]', space=smem, size = 0x4, offset = 0x4, fixed_abs, tag = 'smem constant byte address 0x4 - core index']
  #allocation1 [shape = 'u32[144,128]{1,0:T(1,128)}', space=vmem, size = 0x12000, scoped, tag = 'internal scratch']
  %s0 = inlined_call_operand.hbm [shape: f32[8,64], index: 0, kind: input, shape index: {}]
  %s1 = inlined_call_operand.hbm [shape: bf16[64,128], index: 1, kind: input, shape index: {}]
  %s2 = inlined_call_operand.vmem [shape: f32[1,128], index: 2, kind: input, shape index: {}]
  %s3 = inlined_call_operand.hbm [shape: f32[8,128], index: 3, kind: output, shape index: {}]
  %s4 = sld [smem:[#allocation0]]
  $region30: #{feat_bottleneck_apply.1} parent=0
    _
  %s6 = ssub.s32 1, %s4
  %s7 = scalar_select 0, %s6, %s4
  $region1: #{feat_bottleneck_apply.1} parent=0
    #allocation2 [shape = 'u8[4096]{0}', space=vmem, size = 0x1000, scoped, tag = 'input window, operand 0, single buffered']
    #allocation3 [shape = 's32[1]{0}', space=sflag, size = 0x4, scoped, tag = 'scoped memory for feat_bottleneck_apply.1']
    #allocation4 [shape = 's32[1]{0}', space=sflag, size = 0x4, scoped, tag = 'scoped memory for feat_bottleneck_apply.1']
    #allocation5 [shape = 'u8[16384]{0}', space=vmem, size = 0x4000, scoped, tag = 'input window, operand 1, single buffered']
    #allocation6 [shape = 's32[1]{0}', space=sflag, size = 0x4, scoped, tag = 'scoped memory for feat_bottleneck_apply.1']
    #allocation7 [shape = 'u8[4096]{0}', space=vmem, size = 0x1000, scoped, tag = 'output window, operand 0, single buffered']
    %8 = vsyncpa [#allocation3], 0
    %9 = vsyncpa [#allocation6], 0
    %10 = vsyncpa [#allocation4], 0
    // Predicated region
    $region2: #{feat_bottleneck_apply.1} parent=1 // pred_check
      _
    $region3: #{feat_bottleneck_apply.1} parent=1 // pred_check_branch
      %12 = sbr.rel (0) target = $region5
    $region4: #{feat_bottleneck_apply.1} parent=1 // pred_region
      %s14 = ssub.s32 128, 128
      %15 = vsyncadd [#allocation3], %s14
      %s17 = sshll.u32 [#allocation2], 4
      %s18 = int_to_ptr.vmem [resolvable:$true] %s17
      %20 = dma.hbm_to_vmem [thread:$0]  %s0, 128, %s18, [#allocation3]
    $region5: #{feat_bottleneck_apply.1} parent=1 // pred_fallthru
      _
    // Predicated region
    $region6: #{feat_bottleneck_apply.1} parent=1 // pred_check
      _
    $region7: #{feat_bottleneck_apply.1} parent=1 // pred_check_branch
      %22 = sbr.rel (0) target = $region9
    $region8: #{feat_bottleneck_apply.1} parent=1 // pred_region
      %s24 = ssub.s32 512, 512
      %25 = vsyncadd [#allocation6], %s24
      %s26 = sshll.u32 [#allocation5], 4
      %s27 = int_to_ptr.vmem [resolvable:$true] %s26
      %32 = dma.hbm_to_vmem [thread:$0]  %s1, 512, %s27, [#allocation6], 64, 64, 4
    $region9: #{feat_bottleneck_apply.1} parent=1 // pred_fallthru
      _
    // Predicated region
    $region10: #{feat_bottleneck_apply.1} parent=1 // pred_check
      _
    $region11: #{feat_bottleneck_apply.1} parent=1 // pred_check_branch
      %34 = sbr.rel (0) target = $region13
    $region12: #{feat_bottleneck_apply.1} parent=1 // pred_region
      _
    $region13: #{feat_bottleneck_apply.1} parent=1 // pred_fallthru
      _
    // Predicated region
    $region14: #{feat_bottleneck_apply.1} parent=1 // pred_check
      _
    $region15: #{feat_bottleneck_apply.1} parent=1 // pred_check_branch
      %36 = sbr.rel (0) target = $region17
    $region16: #{feat_bottleneck_apply.1} parent=1 // pred_region
      %37 = dma.done [#allocation3], 128
    $region17: #{feat_bottleneck_apply.1} parent=1 // pred_fallthru
      _
    // Predicated region
    $region18: #{feat_bottleneck_apply.1} parent=1 // pred_check
      _
    $region19: #{feat_bottleneck_apply.1} parent=1 // pred_check_branch
      %39 = sbr.rel (0) target = $region21
    $region20: #{feat_bottleneck_apply.1} parent=1 // pred_region
      %40 = dma.done [#allocation6], 512
    $region21: #{feat_bottleneck_apply.1} parent=1 // pred_fallthru
      _
    %v42 = vld [vmem:[#allocation2] sm:$0xff]
    %v43 = vpack.c.bf16 %v42, %v42
    %v44 = vld [vmem:[#allocation5] sm:$0xf]
    %v45 = vld [vmem:[#allocation5 + $0x4] sm:$0xf]
    %v46 = vld [vmem:[#allocation5 + $0x8] sm:$0xf]
    %v47 = vld [vmem:[#allocation5 + $0xc] sm:$0xf]
    %v48 = vld [vmem:[#allocation5 + $0x10] sm:$0xf]
    %v49 = vld [vmem:[#allocation5 + $0x14] sm:$0xf]
    %v50 = vld [vmem:[#allocation5 + $0x18] sm:$0xf]
    %v51 = vld [vmem:[#allocation5 + $0x1c] sm:$0xf]
    %v52 = vld [vmem:[%s2] sm:$0x1]
    %v54 = vlaneseq
    %v55 = vshrl.u32 %v54, 7
    %v56 = vsub.s32 0, %v55
    %v57 = vrot.slane %v52, %v56
    %v67 = vunpack.c.l.b16 %v44
    %v68 = vunpack.c.l.b16 %v45
    %v69 = vunpack.c.l.b16 %v46
    %v70 = vunpack.c.l.b16 %v47
    %v71 = vunpack.c.l.b16 %v48
    %v72 = vunpack.c.l.b16 %v49
    %v73 = vunpack.c.l.b16 %v50
    %v74 = vunpack.c.l.b16 %v51
    %v75 = vpack.c.b16 %v68, %v67
    %v76 = vpack.c.b16 %v70, %v69
    %v77 = vpack.c.b16 %v72, %v71
    %v78 = vpack.c.b16 %v74, %v73
    %vm83 = vcmask 523264
    %v85 = vsel %vm83, %v43, 0
    %87 = vmatprep.subr.bf16.mxu0 0
    %88 = vmatpush1.bf16.msra.mxu0 0
    %89 = vmatprep.subr.bf16.mxu0 0
    %90 = vmatpush1.bf16.msra.mxu0 0
    %91 = vmatprep.subr.bf16.mxu0 0
    %92 = vmatpush1.bf16.msra.mxu0 0
    %93 = vmatprep.subr.bf16.mxu0 0
    %94 = vmatpush1.bf16.msra.mxu0 0
    %95 = vmatprep.subr.bf16.mxu0 0
    %96 = vmatpush1.bf16.msra.mxu0 %v78
    %97 = vmatprep.subr.bf16.mxu0 0
    %98 = vmatpush1.bf16.msra.mxu0 %v77
    %99 = vmatprep.subr.bf16.mxu0 0
    %100 = vmatpush1.bf16.msra.mxu0 %v76
    %101 = vmatprep.subr.bf16.mxu0 0
    %102 = vmatpush1.bf16.msra.mxu0 %v75
    %103 = vmatprep.subr.bf16.mxu0 0
    %104 = vmatpush2.bf16.msra.mxu0 0
    %105 = vmatprep.subr.bf16.mxu0 0
    %106 = vmatpush2.bf16.msra.mxu0 0
    %107 = vmatprep.subr.bf16.mxu0 0
    %108 = vmatpush2.bf16.msra.mxu0 0
    %109 = vmatprep.subr.bf16.mxu0 0
    %110 = vmatpush2.bf16.msra.mxu0 0
    %111 = vmatprep.subr.bf16.mxu0 0
    %112 = vmatpush2.bf16.msra.mxu0 0
    %113 = vmatprep.subr.bf16.mxu0 0
    %114 = vmatpush2.bf16.msra.mxu0 0
    %115 = vmatprep.subr.bf16.mxu0 0
    %116 = vmatpush2.bf16.msra.mxu0 0
    %117 = vmatprep.subr.bf16.mxu0 0
    %118 = vmatpush2.bf16.msra.mxu0 0
    %119 = vmatprep.mubr.bf16.mxu0 0
    %120 = vmatmul.mubr.bf16.gmra.mxu0 %v85
    %v121 = vpop.f32.mrf.mxu0
    %v122 = vadd.f32 %v57, %v121
    %v123 = vpop.f32.mrf.mxu0
    %v124 = vpop.f32.mrf.mxu0
    %v125 = vpop.f32.mrf.mxu0
    %126 = vdwg.mxu0
    %127 = vst [vmem:[#allocation7] sm:$0xff] %v122
    // Predicated region
    $region22: #{feat_bottleneck_apply.1} parent=1 // pred_check
      _
    $region23: #{feat_bottleneck_apply.1} parent=1 // pred_check_branch
      %129 = sbr.rel (0) target = $region25
    $region24: #{feat_bottleneck_apply.1} parent=1 // pred_region
      %s131 = ssub.s32 128, 128
      %132 = vsyncadd [#allocation4], %s131
      %s134 = sshll.u32 [#allocation7], 4
      %s135 = int_to_ptr.vmem [resolvable:$true] %s134
      %137 = dma.vmem_to_hbm [thread:$0]  %s135, 128, %s3, [#allocation4]
    $region25: #{feat_bottleneck_apply.1} parent=1 // pred_fallthru
      _
    // Predicated region
    $region26: #{feat_bottleneck_apply.1} parent=1 // pred_check
      _
    $region27: #{feat_bottleneck_apply.1} parent=1 // pred_check_branch
      %139 = sbr.rel (0) target = $region29
    $region28: #{feat_bottleneck_apply.1} parent=1 // pred_region
      %140 = dma.done [#allocation4], 128
    $region29: #{feat_bottleneck_apply.1} parent=1 // pred_fallthru
      _
    %141 = vsyncpa [#allocation3], 1
    %142 = vsyncpa [#allocation6], 1
    %143 = vsyncpa [#allocation4], 1

</llo_original>
